<compile_context>
chip_gen: v7x
topology: tpu7x:2x2x1
jax: 0.10.0
libtpu: 0.0.40
codegen_flags: <defaults>
</compile_context>

<pallas_src>
import functools
import math

import jax
import jax.numpy as jnp
from jax.experimental import pallas as pl
from jax.experimental.pallas import tpu as pltpu


# ---------------------------------------------------------------------------
# Parameter / buffer construction (deterministic, mirrors PyTorch __init__)
# ---------------------------------------------------------------------------
def make_pos_enc_mat(seq_length: int, emb_dim: int, base_feq: float = 8.0) -> jnp.ndarray:
    """Replicates the double python loop in PositionalEncoder.__init__.

    Note: like the PyTorch loop, the cos column intentionally uses exponent
    2*(i+1)/emb_dim (not the Vaswani 2*i/emb_dim); emb_dim must be even.
    """
    assert emb_dim % 2 == 0, "PositionalEncoder requires an even emb_dim"
    pos = jnp.arange(seq_length, dtype=jnp.float32)[:, None]          # (S, 1)
    i_even = jnp.arange(0, emb_dim, 2, dtype=jnp.float32)[None, :]    # (1, E/2)
    sin_vals = jnp.sin(pos / jnp.power(base_feq, 2.0 * i_even / emb_dim))
    cos_vals = jnp.cos(pos / jnp.power(base_feq, 2.0 * (i_even + 1.0) / emb_dim))
    mat = jnp.zeros((seq_length, emb_dim), dtype=jnp.float32)
    mat = mat.at[:, 0::2].set(sin_vals)
    mat = mat.at[:, 1::2].set(cos_vals)
    return mat


# ---------------------------------------------------------------------------
# Tile selection helpers
# ---------------------------------------------------------------------------
_LANE = 128


def _sublane_unit(dtype) -> int:
    """Min sublane tiling unit: 8 for f32, 16 for bf16, 32 for int8/fp8."""
    return max(8, 32 // jnp.dtype(dtype).itemsize)


def _round_down(x: int, unit: int) -> int:
    return (x // unit) * unit


def _pick_block(full: int, unit: int, cap: int) -> int:
    """Largest multiple of `unit` <= min(full, cap); `full` if full <= unit.

    A block equal to the full array dim is always legal; for larger dims a
    unit-aligned block is used and pl.cdiv + Pallas masking handle any
    ragged tail (no exact-divisor requirement -> no huge-block fallback).
    """
    if full <= unit:
        return full
    return max(unit, _round_down(min(full, cap), unit))


def _vmem_capacity_bytes():
    """Best-effort physical-VMEM query; None if unknown (e.g. CPU tracing)."""
    try:
        info = pltpu.get_tpu_info()
        cap = getattr(info, "vmem_capacity_bytes", None)
        if cap:
            return int(cap)
    except Exception:
        pass
    return None


def _tile_plan(B: int, SE: int, dtype):
    """Returns (tb, tc, vmem_limit_bytes) for the flattened (B, SE) problem."""
    itemsize = jnp.dtype(dtype).itemsize
    sub = _sublane_unit(dtype)

    vmem_cap = _vmem_capacity_bytes()
    if vmem_cap is not None and vmem_cap >= (100 << 20):
        # v5e / v6e: 128 MiB physical VMEM. Bigger tiles amortize per-step
        # overhead; explicit 64 MiB limit covers v5e's 16 MiB default scope.
        tile_budget = 4 << 20          # bytes per x/out buffer per pipeline slot
        vmem_limit = 64 << 20
    else:
        # v7x (64 MiB physical) or unknown: stay conservative, default scope.
        tile_budget = 2 << 20
        vmem_limit = None

    # Lane (column) tile: cap so the sublane-PADDED (1, tc) PE block costs at
    # most ~tile_budget/4 per buffer (a 1-row block occupies `sub` sublanes).
    tc_cap = max(_LANE, (tile_budget // 4) // (sub * itemsize))
    tc = _pick_block(SE, _LANE, tc_cap)

    # Sublane (batch) tile under the per-buffer budget.
    tb_cap = max(1, tile_budget // (itemsize * tc))
    tb = _pick_block(B, sub, tb_cap)

    # Guarantee >= 2 grid steps along a "parallel" axis so v7x's 2 TensorCores
    # both stream (near-free on 1-TC v5e/v6e: ~0.35 us extra per step).
    if pl.cdiv(SE, tc) == 1 and pl.cdiv(B, tb) == 1:
        if SE >= 2 * _LANE:
            tc = max(_LANE, _round_down(SE // 2, _LANE))
        elif B >= 2 * sub:
            tb = max(sub, _round_down(B // 2, sub))

    return tb, tc, vmem_limit


# ---------------------------------------------------------------------------
# Pallas kernel: out = x * emb_scale + pos_enc  (pos_enc broadcast over batch)
# ---------------------------------------------------------------------------
def _pos_enc_kernel(x_ref, pe_ref, o_ref, *, emb_scale: float):
    # x_ref/o_ref: (tb, tc) lane-dense tile of the flattened (B, S*E) view.
    # pe_ref:      (1, tc) matching PE column slice; broadcasts over rows.
    x = x_ref[...]
    o_ref[...] = x * jnp.asarray(emb_scale, x.dtype) + pe_ref[...]


def positional_encoder_forward(x: jnp.ndarray,
                               pos_enc_mat: jnp.ndarray,
                               emb_scale: float,
                               *,
                               donate_x: bool = False) -> jnp.ndarray:
    """x: (B, S, E); pos_enc_mat: (S_full, E) with S_full >= S.

    donate_x=True aliases the output onto x's buffer (use only when x is dead
    after this op).  Pass bf16 x (and a pre-cast pos_enc_mat) in production to
    halve HBM traffic — this kernel is purely bandwidth-bound.
    """
    B, S, E = x.shape
    SE = S * E
    # In production, slice/cast/flatten PE once at init, not per call.
    pe2 = pos_enc_mat[:S, :].astype(x.dtype).reshape(1, SE)
    x2 = x.reshape(B, SE)                       # free row-major view

    tb, tc, vmem_limit = _tile_plan(B, SE, x.dtype)
    # Grid: columns OUTER, batch INNER -> PE block index is constant across
    # consecutive steps, so the pipeline keeps the PE slice resident.
    grid = (pl.cdiv(SE, tc), pl.cdiv(B, tb))

    kernel = functools.partial(_pos_enc_kernel, emb_scale=float(emb_scale))

    out2 = pl.pallas_call(
        kernel,
        out_shape=jax.ShapeDtypeStruct((B, SE), x.dtype),
        grid_spec=pltpu.PrefetchScalarGridSpec(
            num_scalar_prefetch=0,
            grid=grid,
            in_specs=[
                pl.BlockSpec((tb, tc), lambda j, i: (i, j)),   # x
                pl.BlockSpec((1, tc), lambda j, i: (0, j)),    # PE (col-only)
            ],
            out_specs=pl.BlockSpec((tb, tc), lambda j, i: (i, j)),
        ),
        compiler_params=pltpu.CompilerParams(
            dimension_semantics=("parallel", "parallel"),
            vmem_limit_bytes=vmem_limit),
        input_output_aliases={0: 0} if donate_x else {},
    )(x2, pe2)

    return out2.reshape(B, S, E)


# ---------------------------------------------------------------------------
# Pure-JAX reference for correctness check
# ---------------------------------------------------------------------------
def positional_encoder_ref(x, pos_enc_mat, emb_scale):
    S = x.shape[1]
    return x * emb_scale + pos_enc_mat[None, :S, :].astype(x.dtype)


if __name__ == "__main__":
    key = jax.random.PRNGKey(0)
    k1, k2, k3, k4 = jax.random.split(key, 4)
    base_feq = 8.0

    # --- Case 1: module-consistent small shape (batch=2, seq=8, emb=32) ----
    S1, E1 = 8, 32
    scale1 = math.sqrt(E1)                      # default emb_scale = sqrt(emb_dim)
    x1 = jax.random.normal(k1, (2, S1, E1), dtype=jnp.float32)
    pe1 = make_pos_enc_mat(S1, E1, base_feq)
    out1 = jax.block_until_ready(positional_encoder_forward(x1, pe1, scale1))
    ref1 = positional_encoder_ref(x1, pe1, scale1)
    assert out1.shape == (2, S1, E1)
    assert jnp.allclose(out1, ref1, atol=1e-5, rtol=1e-5), "mismatch (case 1)"

    # --- Case 2: multi-column-tile grid (seq=512, emb=256) ------------------
    S2, E2 = 512, 256
    scale2 = math.sqrt(E2)
    x2 = jax.random.normal(k2, (2, S2, E2), dtype=jnp.float32)
    pe2 = make_pos_enc_mat(S2, E2, base_feq)
    out2 = jax.block_until_ready(positional_encoder_forward(x2, pe2, scale2))
    ref2 = positional_encoder_ref(x2, pe2, scale2)
    assert jnp.allclose(out2, ref2, atol=1e-5, rtol=1e-5), "mismatch (case 2)"

    # --- Case 3: ragged lane tail (S*E = 224, not a multiple of 128) --------
    S3, E3 = 7, 32
    scale3 = math.sqrt(E3)
    x3 = jax.random.normal(k3, (4, S3, E3), dtype=jnp.float32)
    pe3 = make_pos_enc_mat(S3, E3, base_feq)
    out3 = jax.block_until_ready(positional_encoder_forward(x3, pe3, scale3))
    ref3 = positional_encoder_ref(x3, pe3, scale3)
    assert jnp.allclose(out3, ref3, atol=1e-5, rtol=1e-5), "mismatch (case 3)"

    # --- Case 4: bf16 hot path (dtype-aware sublane tiling) ------------------
    S4, E4 = 128, 64
    scale4 = math.sqrt(E4)
    x4 = jax.random.normal(k4, (16, S4, E4), dtype=jnp.float32).astype(jnp.bfloat16)
    pe4 = make_pos_enc_mat(S4, E4, base_feq)
    out4 = jax.block_until_ready(positional_encoder_forward(x4, pe4, scale4))
    ref4 = positional_encoder_ref(x4, pe4, scale4)
    assert jnp.allclose(out4.astype(jnp.float32), ref4.astype(jnp.float32),
                        atol=5e-2, rtol=5e-2), "mismatch (case 4, bf16)"

    print("KERNEL_OK")
</pallas_src>

<mosaic_0001>
module attributes {stable_mosaic.version = 11 : i64} {
  func.func @_pos_enc_kernel(%arg0: i32, %arg1: i32, %arg2: memref<2x128xf32, #tpu.memory_space<vmem>>, %arg3: memref<1x128xf32, #tpu.memory_space<vmem>>, %arg4: memref<2x128xf32, #tpu.memory_space<vmem>>) attributes {dimension_semantics = [#tpu.dimension_semantics<parallel>, #tpu.dimension_semantics<parallel>], iteration_bounds = array<i64: 2, 1>, scalar_prefetch = 0 : i64, scratch_operands = 0 : i64, tpu.core_type = #tpu.core_type<tc>, window_params = [{transform_indices = @transform_0, window_bounds = array<i64: 2, 128>}, {transform_indices = @transform_1, window_bounds = array<i64: 1, 128>}, {transform_indices = @transform_2, window_bounds = array<i64: 2, 128>}]} {
    %c0 = arith.constant 0 : index
    %c0_0 = arith.constant 0 : index
    %0 = vector.load %arg2[%c0, %c0_0] : memref<2x128xf32, #tpu.memory_space<vmem>>, vector<2x128xf32>
    %cst = arith.constant 5.65685415 : f32
    %1 = vector.broadcast %cst : f32 to vector<2x128xf32>
    %2 = arith.mulf %0, %1 : vector<2x128xf32>
    %c0_1 = arith.constant 0 : index
    %c0_2 = arith.constant 0 : index
    %3 = vector.load %arg3[%c0_1, %c0_2] : memref<1x128xf32, #tpu.memory_space<vmem>>, vector<1x128xf32>
    %4 = vector.broadcast %3 : vector<1x128xf32> to vector<2x128xf32>
    %5 = arith.addf %2, %4 : vector<2x128xf32>
    %c0_3 = arith.constant 0 : index
    %c0_4 = arith.constant 0 : index
    %6 = vector.load %arg4[%c0_3, %c0_4] : memref<2x128xf32, #tpu.memory_space<vmem>>, vector<2x128xf32>
    tpu.vector_store %arg4[%c0_3, %c0_4], %5 {strides = array<i32>} : memref<2x128xf32, #tpu.memory_space<vmem>>, vector<2x128xf32>,
    return
  }
  func.func @transform_0(%arg0: i32, %arg1: i32) -> (i32, i32) {
    %c0_i32 = arith.constant 0 : i32
    return %arg1, %arg0 : i32, i32
  }
  func.func @transform_1(%arg0: i32, %arg1: i32) -> (i32, i32) {
    %c0_i32 = arith.constant 0 : i32
    %c0_i32_0 = arith.constant 0 : i32
    return %c0_i32, %arg0 : i32, i32
  }
  func.func @transform_2(%arg0: i32, %arg1: i32) -> (i32, i32) {
    %c0_i32 = arith.constant 0 : i32
    return %arg1, %arg0 : i32, i32
  }
}

</mosaic_0001>

<llo_original>
// kernel: tpu_custom_call.1
$region0: #{tpu_custom_call.1}
  #allocation0 [shape = 'u32[]', space=smem, size = 0x4, offset = 0x4, fixed_abs, tag = 'smem constant byte address 0x4 - core index']
  #allocation1 [shape = 'u32[144,128]{1,0:T(1,128)}', space=vmem, size = 0x12000, scoped, tag = 'internal scratch']
  %s0 = inlined_call_operand.hbm [shape: f32[2,256], index: 0, kind: input, shape index: {}]
  %s1 = inlined_call_operand.vmem [shape: f32[1,256], index: 1, kind: input, shape index: {}]
  %s2 = inlined_call_operand.hbm [shape: f32[2,256], index: 2, kind: output, shape index: {}]
  %s3 = sld [smem:[#allocation0]]
  $region45: #{tpu_custom_call.1} parent=0
    _
  %s5 = ssub.s32 1, %s3
  %s6 = scalar_select 0, %s5, %s3
  $region1: #{tpu_custom_call.1} parent=0
    #allocation2 [shape = 'u8[2048]{0}', space=vmem, size = 0x800, scoped, tag = 'input window, operand 0']
    #allocation3 [shape = 's32[2]{0}', space=sflag, size = 0x8, scoped, tag = 'scoped memory for tpu_custom_call.1']
    #allocation4 [shape = 's32[2]{0}', space=sflag, size = 0x8, scoped, tag = 'scoped memory for tpu_custom_call.1']
    #allocation5 [shape = 'u8[2048]{0}', space=vmem, size = 0x800, scoped, tag = 'output window, operand 0']
    %7 = vsyncpa [#allocation3], 0
    %s8 = scalar_lea.sflag [#allocation3], 1
    %9 = vsyncpa %s8, 0
    %10 = vsyncpa [#allocation4], 0
    %s11 = scalar_lea.sflag [#allocation4], 1
    %12 = vsyncpa %s11, 0
    loop: start=0, step=1, limit=4
    $region2: #{tpu_custom_call.1} parent=1 // loop_pre_header
      _
    $region3: #{tpu_custom_call.1} parent=1 // loop_header
      %s14 = sphi 0, %s18
      %p15 = scmp.ge.s32.totalorder %s14, 4
      %s21 = sphi 0, %s33
      %s22 = sphi 0, %s29
      %s23 = sphi 0, %s21
      %s24 = sphi 0, %s22
      %s25 = sphi 0, %s23
      %s26 = sphi 0, %s24
      %s38 = sphi 0, %s40
      %s41 = sphi 0, %s38
      %s42 = sphi 0, %s41
      %s58 = sphi 0, %s42
      %s64 = sphi 0, %s66
      %s67 = sphi 0, %s64
      %s68 = sphi 0, %s67
      %s84 = sphi 0, %s68
      %s92 = sphi 0, %s94
      %s95 = sphi 0, %s92
      %s96 = sphi 0, %s95
      %s112 = sphi 0, %s96
    $region4: #{tpu_custom_call.1} parent=1 // loop_header_branch
      %17 = sbr.rel (%p15) target = $region8
    $region5: #{tpu_custom_call.1} parent=1 // loop_body
      %s19 = ssub.s32 %s14, 1
      %s20 = ssub.s32 %s14, 2
      %s27 = sadd.s32 1, %s22
      %p28 = scmp.ge.s32.totalorder %s27, 1
      %s29 = scalar_select %p28, 0, %s27
      %s30 = sadd.s32 1, %s21
      %s31 = scalar_select %p28, %s30, %s21
      %p32 = scmp.ge.s32.totalorder %s31, 2
      %s33 = scalar_select %p32, 0, %s31
      %s34 = ssub.s32 %s22, %s29
      %s35 = ssub.s32 %s21, %s33
      %s36 = sor.u32 %s34, %s35
      %p37 = scmp.eq.s32.totalorder %s36, 0
      %s39 = sadd.s32 %s38, 1
      %s40 = scalar_select %p37, %s38, %s39
      %p43 = pneg %p37
      %p44 = scmp.eq.s32.totalorder %s14, 1
      %p45 = por %p43, %p44
      %p46 = scmp.ne.s32.totalorder %s38, %s41
      %p47 = scmp.eq.s32.totalorder %s14, 0
      %p48 = por %p46, %p47
      %p49 = scmp.ne.s32.totalorder %s38, %s41
      %p50 = scmp.eq.s32.totalorder %s19, 1
      %p51 = por %p49, %p50
      %p52 = scmp.ne.s32.totalorder %s41, %s42
      %p53 = scmp.eq.s32.totalorder %s19, 0
      %p54 = por %p52, %p53
      %p55 = scmp.ne.s32.totalorder %s41, %s42
      %p56 = scmp.eq.s32.totalorder %s20, 1
      %p57 = por %p55, %p56
      %p59 = scmp.ne.s32.totalorder %s42, %s58
      %p60 = scmp.eq.s32.totalorder %s20, 0
      %p61 = por %p59, %p60
      %s62 = ssub.s32 %s21, %s33
      %p63 = scmp.eq.s32.totalorder %s62, 0
      %s65 = sadd.s32 %s64, 1
      %s66 = scalar_select %p63, %s64, %s65
      %p69 = pneg %p63
      %p70 = scmp.eq.s32.totalorder %s14, 1
      %p71 = por %p69, %p70
      %p72 = scmp.ne.s32.totalorder %s64, %s67
      %p73 = scmp.eq.s32.totalorder %s14, 0
      %p74 = por %p72, %p73
      %p75 = scmp.ne.s32.totalorder %s64, %s67
      %p76 = scmp.eq.s32.totalorder %s19, 1
      %p77 = por %p75, %p76
      %p78 = scmp.ne.s32.totalorder %s67, %s68
      %p79 = scmp.eq.s32.totalorder %s19, 0
      %p80 = por %p78, %p79
      %p81 = scmp.ne.s32.totalorder %s67, %s68
      %p82 = scmp.eq.s32.totalorder %s20, 1
      %p83 = por %p81, %p82
      %p85 = scmp.ne.s32.totalorder %s68, %s84
      %p86 = scmp.eq.s32.totalorder %s20, 0
      %p87 = por %p85, %p86
      %s88 = ssub.s32 %s22, %s29
      %s89 = ssub.s32 %s21, %s33
      %s90 = sor.u32 %s88, %s89
      %p91 = scmp.eq.s32.totalorder %s90, 0
      %s93 = sadd.s32 %s92, 1
      %s94 = scalar_select %p91, %s92, %s93
      %p97 = pneg %p91
      %p98 = scmp.eq.s32.totalorder %s14, 1
      %p99 = por %p97, %p98
      %p100 = scmp.ne.s32.totalorder %s92, %s95
      %p101 = scmp.eq.s32.totalorder %s14, 0
      %p102 = por %p100, %p101
      %p103 = scmp.ne.s32.totalorder %s92, %s95
      %p104 = scmp.eq.s32.totalorder %s19, 1
      %p105 = por %p103, %p104
      %p106 = scmp.ne.s32.totalorder %s95, %s96
      %p107 = scmp.eq.s32.totalorder %s19, 0
      %p108 = por %p106, %p107
      %p109 = scmp.ne.s32.totalorder %s95, %s96
      %p110 = scmp.eq.s32.totalorder %s20, 1
      %p111 = por %p109, %p110
      %p113 = scmp.ne.s32.totalorder %s96, %s112
      %p114 = scmp.eq.s32.totalorder %s20, 0
      %p115 = por %p113, %p114
      %p116 = scmp.le.s32.totalorder 1, %s14
      %p117 = scmp.lt.s32.totalorder %s14, 3
      %p118 = pnand %p116, %p117
      %p119 = pneg %p118
      // Predicated region
      $region9: #{tpu_custom_call.1} parent=5 // pred_check
        _
      $region10: #{tpu_custom_call.1} parent=5 // pred_check_branch
        %121 = sbr.rel (%p118) target = $region12
      $region11: #{tpu_custom_call.1} parent=5 // pred_region
        %s122 = ssub.s32 %s14, 1
      $region12: #{tpu_custom_call.1} parent=5 // pred_fallthru
        _
      %p123 = scmp.lt.s32.totalorder %s14, 2
      // Predicated region
      $region13: #{tpu_custom_call.1} parent=5 // pred_check
        %p124 = pneg %p123
      $region14: #{tpu_custom_call.1} parent=5 // pred_check_branch
        %126 = sbr.rel (%p124) target = $region16
      $region15: #{tpu_custom_call.1} parent=5 // pred_region
        // Predicated region
        $region17: #{tpu_custom_call.1} parent=15 // pred_check
          %p127 = pneg %p48
        $region18: #{tpu_custom_call.1} parent=15 // pred_check_branch
          %129 = sbr.rel (%p127) target = $region20
        $region19: #{tpu_custom_call.1} parent=15 // pred_region
          %s130 = sand.u32 %s38, 1
          %s131 = scalar_lea.sflag [#allocation3], %s130
          %s132 = sand.u32 %s38, 1
          %s133 = smul.addr %s132, 2
          %s134 = scalar_lea.vmem [#allocation2], %s133
          %s136 = ssub.s32 32, 32
          %137 = vsyncadd %s131, %s136
          %s138 = smul.addr %s22, 2
          %s139 = sadd.s32 %s21, %s138
          %s140 = smul.addr %s139, 32
          %s141 = scalar_lea.hbm %s0, %s140
          %s143 = sshll.u32 %s134, 4
          %s144 = int_to_ptr.vmem [resolvable:$true] %s143
          %146 = dma.hbm_to_vmem [thread:$0]  %s141, 32, %s144, %s131
        $region20: #{tpu_custom_call.1} parent=15 // pred_fallthru
          _
        // Predicated region
        $region21: #{tpu_custom_call.1} parent=15 // pred_check
          %p147 = pneg %p74
        $region22: #{tpu_custom_call.1} parent=15 // pred_check_branch
          %149 = sbr.rel (%p147) target = $region24
        $region23: #{tpu_custom_call.1} parent=15 // pred_region
          %p150 = scmp.lt.s32.totalorder %s21, 1
          %s151 = scalar_select %p150, %s21, 1
          %s152 = scalar_lea.vmem %s1, %s151
        $region24: #{tpu_custom_call.1} parent=15 // pred_fallthru
          _
      $region16: #{tpu_custom_call.1} parent=5 // pred_fallthru
        _
      %p153 = scmp.le.s32.totalorder 1, %s14
      %p154 = scmp.lt.s32.totalorder %s14, 3
      %p155 = pnand %p153, %p154
      %p156 = pneg %p155
      // Predicated region
      $region25: #{tpu_custom_call.1} parent=5 // pred_check
        _
      $region26: #{tpu_custom_call.1} parent=5 // pred_check_branch
        %158 = sbr.rel (%p155) target = $region28
      $region27: #{tpu_custom_call.1} parent=5 // pred_region
        %s159 = ssub.s32 %s14, 1
        %s160 = sand.u32 %s41, 1
        %s161 = scalar_lea.sflag [#allocation3], %s160
        %s162 = sand.u32 %s41, 1
        %s163 = smul.addr %s162, 2
        %s164 = scalar_lea.vmem [#allocation2], %s163
        // Predicated region
        $region29: #{tpu_custom_call.1} parent=27 // pred_check
          %p165 = pneg %p54
        $region30: #{tpu_custom_call.1} parent=27 // pred_check_branch
          %167 = sbr.rel (%p165) target = $region32
        $region31: #{tpu_custom_call.1} parent=27 // pred_region
          %168 = dma.done %s161, 32
        $region32: #{tpu_custom_call.1} parent=27 // pred_fallthru
          _
        %s169 = sand.u32 %s41, 1
        %s170 = scalar_lea.sflag [#allocation3], %s169
        %s171 = sand.u32 %s41, 1
        %s172 = smul.addr %s171, 2
        %s173 = scalar_lea.vmem [#allocation2], %s172
        %p174 = pneg %p54
        %p175 = pneg %p51
        %p176 = scmp.lt.s32.totalorder %s23, 1
        %s177 = scalar_select %p176, %s23, 1
        %s178 = scalar_lea.vmem %s1, %s177
        %p179 = pneg %p80
        %p180 = pneg %p77
        %p181 = pneg %p108
        %p182 = pneg %p105
        %s183 = sand.u32 %s95, 1
        %s184 = scalar_lea.sflag [#allocation4], %s183
        %s185 = sand.u32 %s95, 1
        %s186 = smul.addr %s185, 2
        %s187 = scalar_lea.vmem [#allocation5], %s186
        %p188 = scmp.lt.s32.totalorder %s23, 1
        %s189 = scalar_select %p188, %s23, 1
        %s190 = scalar_lea.vmem %s1, %s189
        %v191 = vld [vmem:[%s164] sm:$0x3]
        %v192 = vmul.f32 %v191, 5.656854
        %v193 = vld [vmem:[%s190] sm:$0x1]
        %v195 = vlaneseq
        %v196 = vshrl.u32 %v195, 7
        %v197 = vsub.s32 0, %v196
        %v198 = vrot.slane %v193, %v197
        %v200 = vadd.f32 %v192, %v198
        %201 = vst [vmem:[%s187] sm:$0x3] %v200
        %s202 = sand.u32 %s95, 1
        %s203 = scalar_lea.sflag [#allocation4], %s202
        %s204 = sand.u32 %s95, 1
        %s205 = smul.addr %s204, 2
        %s206 = scalar_lea.vmem [#allocation5], %s205
        // Predicated region
        $region33: #{tpu_custom_call.1} parent=27 // pred_check
          %p207 = pneg %p105
        $region34: #{tpu_custom_call.1} parent=27 // pred_check_branch
          %209 = sbr.rel (%p207) target = $region36
        $region35: #{tpu_custom_call.1} parent=27 // pred_region
          %s211 = ssub.s32 32, 32
          %212 = vsyncadd %s203, %s211
          %s213 = smul.addr %s24, 2
          %s214 = sadd.s32 %s23, %s213
          %s215 = smul.addr %s214, 32
          %s216 = scalar_lea.hbm %s2, %s215
          %s218 = sshll.u32 %s206, 4
          %s219 = int_to_ptr.vmem [resolvable:$true] %s218
          %221 = dma.vmem_to_hbm [thread:$0]  %s219, 32, %s216, %s203
        $region36: #{tpu_custom_call.1} parent=27 // pred_fallthru
          _
      $region28: #{tpu_custom_call.1} parent=5 // pred_fallthru
        _
      %p222 = scmp.le.s32.totalorder 2, %s14
      // Predicated region
      $region37: #{tpu_custom_call.1} parent=5 // pred_check
        %p223 = pneg %p222
      $region38: #{tpu_custom_call.1} parent=5 // pred_check_branch
        %225 = sbr.rel (%p223) target = $region40
      $region39: #{tpu_custom_call.1} parent=5 // pred_region
        %s226 = ssub.s32 %s14, 2
        // Predicated region
        $region41: #{tpu_custom_call.1} parent=39 // pred_check
          %p227 = pneg %p111
        $region42: #{tpu_custom_call.1} parent=39 // pred_check_branch
          %229 = sbr.rel (%p227) target = $region44
        $region43: #{tpu_custom_call.1} parent=39 // pred_region
          %s230 = sand.u32 %s96, 1
          %s231 = scalar_lea.sflag [#allocation4], %s230
          %s232 = sand.u32 %s96, 1
          %s233 = smul.addr %s232, 2
          %s234 = scalar_lea.vmem [#allocation5], %s233
          %235 = dma.done %s231, 32
        $region44: #{tpu_custom_call.1} parent=39 // pred_fallthru
          _
      $region40: #{tpu_custom_call.1} parent=5 // pred_fallthru
        _
    $region6: #{tpu_custom_call.1} parent=1 // loop_footer
      %s18 = sadd.s32 1, %s14
    $region7: #{tpu_custom_call.1} parent=1 // loop_footer_branch
      %13 = sbr.rel target = $region3
    $region8: #{tpu_custom_call.1} parent=1 // loop_exit
      _
    %236 = vsyncpa [#allocation3], 1
    %s237 = scalar_lea.sflag [#allocation3], 1
    %238 = vsyncpa %s237, 1
    %239 = vsyncpa [#allocation4], 1
    %s240 = scalar_lea.sflag [#allocation4], 1
    %241 = vsyncpa %s240, 1

</llo_original>
